<compile_context>
chip_gen: v7x
topology: tpu7x:2x2x1
jax: 0.10.0
libtpu: 0.0.40
codegen_flags: <defaults>
</compile_context>

<pallas_src>
import jax
import jax.numpy as jnp
from jax.experimental import pallas as pl
from jax.experimental.pallas import tpu as pltpu

EPS = 1e-5


def _bn_relu_kernel(x_ref, gamma_ref, beta_ref, o_ref):
    # x_ref: (Cb, HW) f32 block; gamma/beta: (Cb, 1) f32 blocks.
    x = x_ref[...]
    inv_n = 1.0 / x.shape[1]

    # One-pass per-channel statistics (biased variance, matching torch
    # BatchNorm2d training-mode forward). Inputs are O(1) magnitude, so the
    # E[x^2] - mean^2 form is well within 1e-4 tolerance in f32.
    s = jnp.sum(x, axis=1, keepdims=True)          # (Cb, 1)
    sq = jnp.sum(x * x, axis=1, keepdims=True)     # (Cb, 1)
    mean = s * inv_n
    var = sq * inv_n - mean * mean
    inv_std = jax.lax.rsqrt(var + EPS)

    # Fold affine params into a single per-channel scale/shift.
    scale = gamma_ref[...] * inv_std               # (Cb, 1)
    shift = beta_ref[...] - mean * scale           # (Cb, 1)

    # Normalize + affine + ReLU in one FMA + max per element.
    o_ref[...] = jnp.maximum(x * scale + shift, 0.0).astype(o_ref.dtype)


def batchnorm_relu(x_nchw, gamma, beta):
    """x_nchw: (1, C, H, W) float32; gamma, beta: (C,) float32."""
    N, C, H, W = x_nchw.shape
    # Module spec has batch 1, so (C, H*W) is a zero-cost view of NCHW.
    # TODO(synk): for N > 1, accumulate sum/sumsq across a batch grid axis
    # instead of transposing (not needed for this module's fixed input).
    assert N == 1, "kernel is specialised for the module's batch-1 input"
    HW = H * W

    x2d = x_nchw.reshape(C, HW)
    g2d = gamma.reshape(C, 1).astype(jnp.float32)
    b2d = beta.reshape(C, 1).astype(jnp.float32)

    # Split channels into 128-wide blocks (C=256 -> 2 independent grid steps,
    # one per v7x TensorCore). Channel blocks are statistically independent.
    c_block = 128 if C % 128 == 0 else C
    grid = (C // c_block,)

    out2d = pl.pallas_call(
        _bn_relu_kernel,
        out_shape=jax.ShapeDtypeStruct((C, HW), x2d.dtype),
        grid_spec=pl.GridSpec(
            grid=grid,
            in_specs=[
                pl.BlockSpec((c_block, HW), lambda i: (i, 0)),
                pl.BlockSpec((c_block, 1), lambda i: (i, 0)),
                pl.BlockSpec((c_block, 1), lambda i: (i, 0)),
            ],
            out_specs=pl.BlockSpec((c_block, HW), lambda i: (i, 0)),
        ),
        compiler_params=pltpu.CompilerParams(
            dimension_semantics=("parallel",),
        ),
    )(x2d, g2d, b2d)

    return out2d.reshape(N, C, H, W)


def _reference(x_nchw, gamma, beta):
    mean = jnp.mean(x_nchw, axis=(0, 2, 3), keepdims=True)
    var = jnp.mean((x_nchw - mean) ** 2, axis=(0, 2, 3), keepdims=True)
    y = (x_nchw - mean) * jax.lax.rsqrt(var + EPS)
    y = y * gamma.reshape(1, -1, 1, 1) + beta.reshape(1, -1, 1, 1)
    return jnp.maximum(y, 0.0)


if __name__ == "__main__":
    key = jax.random.PRNGKey(0)
    kx, kg, kb = jax.random.split(key, 3)

    N, C, H, W = 1, 256, 14, 14  # matches BatchNorm2d(256) and the module input
    x = jax.random.normal(kx, (N, C, H, W), dtype=jnp.float32)
    gamma = 1.0 + 0.1 * jax.random.normal(kg, (C,), dtype=jnp.float32)
    beta = 0.1 * jax.random.normal(kb, (C,), dtype=jnp.float32)

    out = batchnorm_relu(x, gamma, beta)
    out = jax.block_until_ready(out)

    ref = _reference(x, gamma, beta)
    assert out.shape == (N, C, H, W)
    assert jnp.allclose(out, ref, atol=1e-4, rtol=1e-4)

    print("KERNEL_OK")
</pallas_src>

<mosaic_0001>
module attributes {stable_mosaic.version = 11 : i64} {
  func.func @_bn_relu_kernel(%arg0: i32, %arg1: memref<128x196xf32, #tpu.memory_space<vmem>>, %arg2: memref<128x1xf32, #tpu.memory_space<vmem>>, %arg3: memref<128x1xf32, #tpu.memory_space<vmem>>, %arg4: memref<128x196xf32, #tpu.memory_space<vmem>>) attributes {dimension_semantics = [#tpu.dimension_semantics<parallel>], iteration_bounds = array<i64: 2>, scalar_prefetch = 0 : i64, scratch_operands = 0 : i64, tpu.core_type = #tpu.core_type<tc>, window_params = [{transform_indices = @transform_0, window_bounds = array<i64: 128, 196>}, {transform_indices = @transform_1, window_bounds = array<i64: 128, 1>}, {transform_indices = @transform_2, window_bounds = array<i64: 128, 1>}, {transform_indices = @transform_3, window_bounds = array<i64: 128, 196>}]} {
    %c0 = arith.constant 0 : index
    %c0_0 = arith.constant 0 : index
    %0 = vector.load %arg1[%c0, %c0_0] : memref<128x196xf32, #tpu.memory_space<vmem>>, vector<128x196xf32>
    %cst = arith.constant dense<0.000000e+00> : vector<128xf32>
    %1 = vector.multi_reduction <add>, %0, %cst [1] : vector<128x196xf32> to vector<128xf32>
    %2 = vector.shape_cast %1 : vector<128xf32> to vector<128x1xf32>
    %3 = arith.mulf %0, %0 : vector<128x196xf32>
    %cst_1 = arith.constant dense<0.000000e+00> : vector<128xf32>
    %4 = vector.multi_reduction <add>, %3, %cst_1 [1] : vector<128x196xf32> to vector<128xf32>
    %5 = vector.shape_cast %4 : vector<128xf32> to vector<128x1xf32>
    %cst_2 = arith.constant 0.00510204071 : f32
    %6 = vector.broadcast %cst_2 : f32 to vector<128x1xf32>
    %7 = arith.mulf %2, %6 : vector<128x1xf32>
    %cst_3 = arith.constant 0.00510204071 : f32
    %8 = vector.broadcast %cst_3 : f32 to vector<128x1xf32>
    %9 = arith.mulf %5, %8 : vector<128x1xf32>
    %10 = arith.mulf %7, %7 : vector<128x1xf32>
    %11 = arith.subf %9, %10 : vector<128x1xf32>
    %cst_4 = arith.constant 9.99999974E-6 : f32
    %12 = vector.broadcast %cst_4 : f32 to vector<128x1xf32>
    %13 = arith.addf %11, %12 : vector<128x1xf32>
    %14 = math.rsqrt %13 : vector<128x1xf32>
    %c0_5 = arith.constant 0 : index
    %c0_6 = arith.constant 0 : index
    %15 = vector.load %arg2[%c0_5, %c0_6] : memref<128x1xf32, #tpu.memory_space<vmem>>, vector<128x1xf32>
    %16 = arith.mulf %15, %14 : vector<128x1xf32>
    %c0_7 = arith.constant 0 : index
    %c0_8 = arith.constant 0 : index
    %17 = vector.load %arg3[%c0_7, %c0_8] : memref<128x1xf32, #tpu.memory_space<vmem>>, vector<128x1xf32>
    %18 = arith.mulf %7, %16 : vector<128x1xf32>
    %19 = arith.subf %17, %18 : vector<128x1xf32>
    %20 = vector.broadcast %16 : vector<128x1xf32> to vector<128x196xf32>
    %21 = arith.mulf %0, %20 : vector<128x196xf32>
    %22 = vector.broadcast %19 : vector<128x1xf32> to vector<128x196xf32>
    %23 = arith.addf %21, %22 : vector<128x196xf32>
    %cst_9 = arith.constant 0.000000e+00 : f32
    %24 = vector.broadcast %cst_9 : f32 to vector<128x196xf32>
    %25 = arith.maximumf %23, %24 : vector<128x196xf32>
    %c0_10 = arith.constant 0 : index
    %c0_11 = arith.constant 0 : index
    %26 = vector.load %arg4[%c0_10, %c0_11] : memref<128x196xf32, #tpu.memory_space<vmem>>, vector<128x196xf32>
    tpu.vector_store %arg4[%c0_10, %c0_11], %25 {strides = array<i32>} : memref<128x196xf32, #tpu.memory_space<vmem>>, vector<128x196xf32>,
    return
  }
  func.func @transform_0(%arg0: i32) -> (i32, i32) {
    %c0_i32 = arith.constant 0 : i32
    %c0_i32_0 = arith.constant 0 : i32
    return %arg0, %c0_i32 : i32, i32
  }
  func.func @transform_1(%arg0: i32) -> (i32, i32) {
    %c0_i32 = arith.constant 0 : i32
    %c0_i32_0 = arith.constant 0 : i32
    return %arg0, %c0_i32 : i32, i32
  }
  func.func @transform_2(%arg0: i32) -> (i32, i32) {
    %c0_i32 = arith.constant 0 : i32
    %c0_i32_0 = arith.constant 0 : i32
    return %arg0, %c0_i32 : i32, i32
  }
  func.func @transform_3(%arg0: i32) -> (i32, i32) {
    %c0_i32 = arith.constant 0 : i32
    %c0_i32_0 = arith.constant 0 : i32
    return %arg0, %c0_i32 : i32, i32
  }
}

</mosaic_0001>

<llo_original>
// kernel: tpu_custom_call.1
$region0: #{tpu_custom_call.1}
  #allocation0 [shape = 'u32[]', space=smem, size = 0x4, offset = 0x4, fixed_abs, tag = 'smem constant byte address 0x4 - core index']
  #allocation1 [shape = 'u32[144,128]{1,0:T(1,128)}', space=vmem, size = 0x12000, scoped, tag = 'internal scratch']
  %s0 = inlined_call_operand.vmem [shape: f32[256,196], index: 0, kind: input, shape index: {}]
  %s1 = inlined_call_operand.vmem [shape: f32[256,1], index: 1, kind: input, shape index: {}]
  %s2 = inlined_call_operand.vmem [shape: f32[256,1], index: 2, kind: input, shape index: {}]
  %s3 = inlined_call_operand.vmem [shape: f32[256,196], index: 3, kind: output, shape index: {}]
  %s4 = sld [smem:[#allocation0]]
  $region45: #{tpu_custom_call.1} parent=0
    _
  %s6 = ssub.s32 1, %s4
  %s7 = scalar_select 0, %s6, %s4
  loop: start=0, step=1, limit=4
  $region2: #{tpu_custom_call.1} parent=0 // loop_pre_header
    _
  $region3: #{tpu_custom_call.1} parent=0 // loop_header
    %s9 = sphi 0, %s13
    %p10 = scmp.ge.s32.totalorder %s9, 4
    %s19 = sphi 0, %s21
    %s22 = sphi 0, %s19
    %s23 = sphi 0, %s22
    %s39 = sphi 0, %s23
    %s45 = sphi 0, %s47
    %s48 = sphi 0, %s45
    %s49 = sphi 0, %s48
    %s65 = sphi 0, %s49
    %s71 = sphi 0, %s73
    %s74 = sphi 0, %s71
    %s75 = sphi 0, %s74
    %s91 = sphi 0, %s75
    %s97 = sphi 0, %s99
    %s100 = sphi 0, %s97
    %s101 = sphi 0, %s100
    %s117 = sphi 0, %s101
  $region4: #{tpu_custom_call.1} parent=0 // loop_header_branch
    %12 = sbr.rel (%p10) target = $region8
  $region5: #{tpu_custom_call.1} parent=0 // loop_body
    %s14 = ssub.s32 %s9, 1
    %s15 = ssub.s32 %s9, 2
    %s16 = sadd.s32 %s9, 1
    %s17 = ssub.s32 %s9, %s16
    %p18 = scmp.eq.s32.totalorder %s17, 0
    %s20 = sadd.s32 %s19, 1
    %s21 = scalar_select %p18, %s19, %s20
    %p24 = pneg %p18
    %p25 = scmp.eq.s32.totalorder %s9, 1
    %p26 = por %p24, %p25
    %p27 = scmp.ne.s32.totalorder %s19, %s22
    %p28 = scmp.eq.s32.totalorder %s9, 0
    %p29 = por %p27, %p28
    %p30 = scmp.ne.s32.totalorder %s19, %s22
    %p31 = scmp.eq.s32.totalorder %s14, 1
    %p32 = por %p30, %p31
    %p33 = scmp.ne.s32.totalorder %s22, %s23
    %p34 = scmp.eq.s32.totalorder %s14, 0
    %p35 = por %p33, %p34
    %p36 = scmp.ne.s32.totalorder %s22, %s23
    %p37 = scmp.eq.s32.totalorder %s15, 1
    %p38 = por %p36, %p37
    %p40 = scmp.ne.s32.totalorder %s23, %s39
    %p41 = scmp.eq.s32.totalorder %s15, 0
    %p42 = por %p40, %p41
    %s43 = ssub.s32 %s9, %s16
    %p44 = scmp.eq.s32.totalorder %s43, 0
    %s46 = sadd.s32 %s45, 1
    %s47 = scalar_select %p44, %s45, %s46
    %p50 = pneg %p44
    %p51 = scmp.eq.s32.totalorder %s9, 1
    %p52 = por %p50, %p51
    %p53 = scmp.ne.s32.totalorder %s45, %s48
    %p54 = scmp.eq.s32.totalorder %s9, 0
    %p55 = por %p53, %p54
    %p56 = scmp.ne.s32.totalorder %s45, %s48
    %p57 = scmp.eq.s32.totalorder %s14, 1
    %p58 = por %p56, %p57
    %p59 = scmp.ne.s32.totalorder %s48, %s49
    %p60 = scmp.eq.s32.totalorder %s14, 0
    %p61 = por %p59, %p60
    %p62 = scmp.ne.s32.totalorder %s48, %s49
    %p63 = scmp.eq.s32.totalorder %s15, 1
    %p64 = por %p62, %p63
    %p66 = scmp.ne.s32.totalorder %s49, %s65
    %p67 = scmp.eq.s32.totalorder %s15, 0
    %p68 = por %p66, %p67
    %s69 = ssub.s32 %s9, %s16
    %p70 = scmp.eq.s32.totalorder %s69, 0
    %s72 = sadd.s32 %s71, 1
    %s73 = scalar_select %p70, %s71, %s72
    %p76 = pneg %p70
    %p77 = scmp.eq.s32.totalorder %s9, 1
    %p78 = por %p76, %p77
    %p79 = scmp.ne.s32.totalorder %s71, %s74
    %p80 = scmp.eq.s32.totalorder %s9, 0
    %p81 = por %p79, %p80
    %p82 = scmp.ne.s32.totalorder %s71, %s74
    %p83 = scmp.eq.s32.totalorder %s14, 1
    %p84 = por %p82, %p83
    %p85 = scmp.ne.s32.totalorder %s74, %s75
    %p86 = scmp.eq.s32.totalorder %s14, 0
    %p87 = por %p85, %p86
    %p88 = scmp.ne.s32.totalorder %s74, %s75
    %p89 = scmp.eq.s32.totalorder %s15, 1
    %p90 = por %p88, %p89
    %p92 = scmp.ne.s32.totalorder %s75, %s91
    %p93 = scmp.eq.s32.totalorder %s15, 0
    %p94 = por %p92, %p93
    %s95 = ssub.s32 %s9, %s16
    %p96 = scmp.eq.s32.totalorder %s95, 0
    %s98 = sadd.s32 %s97, 1
    %s99 = scalar_select %p96, %s97, %s98
    %p102 = pneg %p96
    %p103 = scmp.eq.s32.totalorder %s9, 1
    %p104 = por %p102, %p103
    %p105 = scmp.ne.s32.totalorder %s97, %s100
    %p106 = scmp.eq.s32.totalorder %s9, 0
    %p107 = por %p105, %p106
    %p108 = scmp.ne.s32.totalorder %s97, %s100
    %p109 = scmp.eq.s32.totalorder %s14, 1
    %p110 = por %p108, %p109
    %p111 = scmp.ne.s32.totalorder %s100, %s101
    %p112 = scmp.eq.s32.totalorder %s14, 0
    %p113 = por %p111, %p112
    %p114 = scmp.ne.s32.totalorder %s100, %s101
    %p115 = scmp.eq.s32.totalorder %s15, 1
    %p116 = por %p114, %p115
    %p118 = scmp.ne.s32.totalorder %s101, %s117
    %p119 = scmp.eq.s32.totalorder %s15, 0
    %p120 = por %p118, %p119
    %p121 = scmp.le.s32.totalorder 1, %s9
    %p122 = scmp.lt.s32.totalorder %s9, 3
    %p123 = pnand %p121, %p122
    %p124 = pneg %p123
    // Predicated region
    $region9: #{tpu_custom_call.1} parent=5 // pred_check
      _
    $region10: #{tpu_custom_call.1} parent=5 // pred_check_branch
      %126 = sbr.rel (%p123) target = $region12
    $region11: #{tpu_custom_call.1} parent=5 // pred_region
      %s127 = ssub.s32 %s9, 1
    $region12: #{tpu_custom_call.1} parent=5 // pred_fallthru
      _
    %p128 = scmp.lt.s32.totalorder %s9, 2
    // Predicated region
    $region13: #{tpu_custom_call.1} parent=5 // pred_check
      %p129 = pneg %p128
    $region14: #{tpu_custom_call.1} parent=5 // pred_check_branch
      %131 = sbr.rel (%p129) target = $region16
    $region15: #{tpu_custom_call.1} parent=5 // pred_region
      // Predicated region
      $region17: #{tpu_custom_call.1} parent=15 // pred_check
        %p132 = pneg %p29
      $region18: #{tpu_custom_call.1} parent=15 // pred_check_branch
        %134 = sbr.rel (%p132) target = $region20
      $region19: #{tpu_custom_call.1} parent=15 // pred_region
        %s135 = smul.u32 16, %s9
        %p136 = scmp.lt.s32.totalorder %s135, 31
        %s137 = scalar_select %p136, %s135, 31
        %s138 = smul.addr %s137, 2
        %s139 = smul.addr %s138, 8
        %s140 = scalar_lea.vmem %s0, %s139
        %s141 = smul.u32 16, %s9
      $region20: #{tpu_custom_call.1} parent=15 // pred_fallthru
        _
      // Predicated region
      $region21: #{tpu_custom_call.1} parent=15 // pred_check
        %p142 = pneg %p55
      $region22: #{tpu_custom_call.1} parent=15 // pred_check_branch
        %144 = sbr.rel (%p142) target = $region24
      $region23: #{tpu_custom_call.1} parent=15 // pred_region
        %s145 = smul.u32 16, %s9
        %p146 = scmp.lt.s32.totalorder %s145, 31
        %s147 = scalar_select %p146, %s145, 31
        %s148 = smul.addr %s147, 8
        %s149 = scalar_lea.vmem %s1, %s148
        %s150 = smul.u32 16, %s9
      $region24: #{tpu_custom_call.1} parent=15 // pred_fallthru
        _
      // Predicated region
      $region25: #{tpu_custom_call.1} parent=15 // pred_check
        %p151 = pneg %p81
      $region26: #{tpu_custom_call.1} parent=15 // pred_check_branch
        %153 = sbr.rel (%p151) target = $region28
      $region27: #{tpu_custom_call.1} parent=15 // pred_region
        %s154 = smul.u32 16, %s9
        %p155 = scmp.lt.s32.totalorder %s154, 31
        %s156 = scalar_select %p155, %s154, 31
        %s157 = smul.addr %s156, 8
        %s158 = scalar_lea.vmem %s2, %s157
        %s159 = smul.u32 16, %s9
      $region28: #{tpu_custom_call.1} parent=15 // pred_fallthru
        _
    $region16: #{tpu_custom_call.1} parent=5 // pred_fallthru
      _
    %p160 = scmp.le.s32.totalorder 1, %s9
    %p161 = scmp.lt.s32.totalorder %s9, 3
    %p162 = pnand %p160, %p161
    %p163 = pneg %p162
    // Predicated region
    $region29: #{tpu_custom_call.1} parent=5 // pred_check
      _
    $region30: #{tpu_custom_call.1} parent=5 // pred_check_branch
      %165 = sbr.rel (%p162) target = $region32
    $region31: #{tpu_custom_call.1} parent=5 // pred_region
      %s166 = ssub.s32 %s9, 1
      %s167 = smul.u32 16, %s14
      %p168 = scmp.lt.s32.totalorder %s167, 31
      %s169 = scalar_select %p168, %s167, 31
      %s170 = smul.addr %s169, 2
      %s171 = smul.addr %s170, 8
      %s172 = scalar_lea.vmem %s0, %s171
      %p173 = pneg %p35
      %p174 = pneg %p32
      %s175 = smul.u32 16, %s14
      %p176 = scmp.lt.s32.totalorder %s175, 31
      %s177 = scalar_select %p176, %s175, 31
      %s178 = smul.addr %s177, 8
      %s179 = scalar_lea.vmem %s1, %s178
      %p180 = pneg %p61
      %p181 = pneg %p58
      %s182 = smul.u32 16, %s14
      %p183 = scmp.lt.s32.totalorder %s182, 31
      %s184 = scalar_select %p183, %s182, 31
      %s185 = smul.addr %s184, 8
      %s186 = scalar_lea.vmem %s2, %s185
      %p187 = pneg %p87
      %p188 = pneg %p84
      %p189 = pneg %p113
      %p190 = pneg %p110
      %s191 = smul.u32 16, %s14
      %p192 = scmp.lt.s32.totalorder %s191, 31
      %s193 = scalar_select %p192, %s191, 31
      %s194 = smul.addr %s193, 2
      %s195 = smul.addr %s194, 8
      %s196 = scalar_lea.vmem %s3, %s195
      %s197 = smul.u32 16, %s14
      %p198 = scmp.lt.s32.totalorder %s197, 31
      %s199 = scalar_select %p198, %s197, 31
      %s200 = smul.addr %s199, 2
      %s201 = smul.addr %s200, 8
      %s202 = scalar_lea.vmem %s0, %s201
      %s203 = smul.u32 16, %s14
      %s204 = smul.u32 16, %s14
      %p205 = scmp.lt.s32.totalorder %s204, 31
      %s206 = scalar_select %p205, %s204, 31
      %s207 = smul.addr %s206, 8
      %s208 = scalar_lea.vmem %s1, %s207
      %s209 = smul.u32 16, %s14
      %s210 = smul.u32 16, %s14
      %p211 = scmp.lt.s32.totalorder %s210, 31
      %s212 = scalar_select %p211, %s210, 31
      %s213 = smul.addr %s212, 8
      %s214 = scalar_lea.vmem %s2, %s213
      %s215 = smul.u32 16, %s14
      %s216 = smul.u32 16, %s14
      %p217 = scmp.lt.s32.totalorder %s216, 31
      %s218 = scalar_select %p217, %s216, 31
      %s219 = smul.addr %s218, 2
      %s220 = smul.addr %s219, 8
      %s221 = scalar_lea.vmem %s3, %s220
      %s222 = smul.u32 16, %s14
      %v223 = vld [vmem:[%s202] sm:$0xff]
      %v224 = vld [vmem:[%s202 + $0x8] sm:$0xff]
      %v225 = vld [vmem:[%s202 + $0x10] sm:$0xff]
      %v226 = vld [vmem:[%s202 + $0x18] sm:$0xff]
      %v227 = vld [vmem:[%s202 + $0x20] sm:$0xff]
      %v228 = vld [vmem:[%s202 + $0x28] sm:$0xff]
      %v229 = vld [vmem:[%s202 + $0x30] sm:$0xff]
      %v230 = vld [vmem:[%s202 + $0x38] sm:$0xff]
      %v231 = vld [vmem:[%s202 + $0x40] sm:$0xff]
      %v232 = vld [vmem:[%s202 + $0x48] sm:$0xff]
      %v233 = vld [vmem:[%s202 + $0x50] sm:$0xff]
      %v234 = vld [vmem:[%s202 + $0x58] sm:$0xff]
      %v235 = vld [vmem:[%s202 + $0x60] sm:$0xff]
      %v236 = vld [vmem:[%s202 + $0x68] sm:$0xff]
      %v237 = vld [vmem:[%s202 + $0x70] sm:$0xff]
      %v238 = vld [vmem:[%s202 + $0x78] sm:$0xff]
      %v239 = vld [vmem:[%s202 + $0x80] sm:$0xff]
      %v240 = vld [vmem:[%s202 + $0x88] sm:$0xff]
      %v241 = vld [vmem:[%s202 + $0x90] sm:$0xff]
      %v242 = vld [vmem:[%s202 + $0x98] sm:$0xff]
      %v243 = vld [vmem:[%s202 + $0xa0] sm:$0xff]
      %v244 = vld [vmem:[%s202 + $0xa8] sm:$0xff]
      %v245 = vld [vmem:[%s202 + $0xb0] sm:$0xff]
      %v246 = vld [vmem:[%s202 + $0xb8] sm:$0xff]
      %v247 = vld [vmem:[%s202 + $0xc0] sm:$0xff]
      %v248 = vld [vmem:[%s202 + $0xc8] sm:$0xff]
      %v249 = vld [vmem:[%s202 + $0xd0] sm:$0xff]
      %v250 = vld [vmem:[%s202 + $0xd8] sm:$0xff]
      %v251 = vld [vmem:[%s202 + $0xe0] sm:$0xff]
      %v252 = vld [vmem:[%s202 + $0xe8] sm:$0xff]
      %v253 = vld [vmem:[%s202 + $0xf0] sm:$0xff]
      %v254 = vld [vmem:[%s202 + $0xf8] sm:$0xff]
      %vm255 = vcmask 556032
      %v256 = vsel %vm255, %v224, 0.0
      %v257 = vadd.f32 %v223, %v256
      %258 = vadd.xlane.f32.xlu0 %v257
      %v259 = vpop.xlane.xlu0 %258
      %v260 = vsel %vm255, %v226, 0.0
      %v261 = vadd.f32 %v225, %v260
      %262 = vadd.xlane.f32.xlu0 %v261
      %v263 = vpop.xlane.xlu0 %262
      %v264 = vsel %vm255, %v228, 0.0
      %v265 = vadd.f32 %v227, %v264
      %266 = vadd.xlane.f32.xlu0 %v265
      %v267 = vpop.xlane.xlu0 %266
      %v268 = vsel %vm255, %v230, 0.0
      %v269 = vadd.f32 %v229, %v268
      %270 = vadd.xlane.f32.xlu0 %v269
      %v271 = vpop.xlane.xlu0 %270
      %v272 = vsel %vm255, %v232, 0.0
      %v273 = vadd.f32 %v231, %v272
      %274 = vadd.xlane.f32.xlu0 %v273
      %v275 = vpop.xlane.xlu0 %274
      %v276 = vsel %vm255, %v234, 0.0
      %v277 = vadd.f32 %v233, %v276
      %278 = vadd.xlane.f32.xlu0 %v277
      %v279 = vpop.xlane.xlu0 %278
      %v280 = vsel %vm255, %v236, 0.0
      %v281 = vadd.f32 %v235, %v280
      %282 = vadd.xlane.f32.xlu0 %v281
      %v283 = vpop.xlane.xlu0 %282
      %v284 = vsel %vm255, %v238, 0.0
      %v285 = vadd.f32 %v237, %v284
      %286 = vadd.xlane.f32.xlu0 %v285
      %v287 = vpop.xlane.xlu0 %286
      %v288 = vsel %vm255, %v240, 0.0
      %v289 = vadd.f32 %v239, %v288
      %290 = vadd.xlane.f32.xlu0 %v289
      %v291 = vpop.xlane.xlu0 %290
      %v292 = vsel %vm255, %v242, 0.0
      %v293 = vadd.f32 %v241, %v292
      %294 = vadd.xlane.f32.xlu0 %v293
      %v295 = vpop.xlane.xlu0 %294
      %v296 = vsel %vm255, %v244, 0.0
      %v297 = vadd.f32 %v243, %v296
      %298 = vadd.xlane.f32.xlu0 %v297
      %v299 = vpop.xlane.xlu0 %298
      %v300 = vsel %vm255, %v246, 0.0
      %v301 = vadd.f32 %v245, %v300
      %302 = vadd.xlane.f32.xlu0 %v301
      %v303 = vpop.xlane.xlu0 %302
      %v304 = vsel %vm255, %v248, 0.0
      %v305 = vadd.f32 %v247, %v304
      %306 = vadd.xlane.f32.xlu0 %v305
      %v307 = vpop.xlane.xlu0 %306
      %v308 = vsel %vm255, %v250, 0.0
      %v309 = vadd.f32 %v249, %v308
      %310 = vadd.xlane.f32.xlu0 %v309
      %v311 = vpop.xlane.xlu0 %310
      %v312 = vsel %vm255, %v252, 0.0
      %v313 = vadd.f32 %v251, %v312
      %314 = vadd.xlane.f32.xlu0 %v313
      %v315 = vpop.xlane.xlu0 %314
      %v316 = vsel %vm255, %v254, 0.0
      %v317 = vadd.f32 %v253, %v316
      %318 = vadd.xlane.f32.xlu0 %v317
      %v319 = vpop.xlane.xlu0 %318
      %v320 = vmul.f32 %v223, %v223
      %v321 = vmul.f32 %v224, %v224
      %v322 = vmul.f32 %v225, %v225
      %v323 = vmul.f32 %v226, %v226
      %v324 = vmul.f32 %v227, %v227
      %v325 = vmul.f32 %v228, %v228
      %v326 = vmul.f32 %v229, %v229
      %v327 = vmul.f32 %v230, %v230
      %v328 = vmul.f32 %v231, %v231
      %v329 = vmul.f32 %v232, %v232
      %v330 = vmul.f32 %v233, %v233
      %v331 = vmul.f32 %v234, %v234
      %v332 = vmul.f32 %v235, %v235
      %v333 = vmul.f32 %v236, %v236
      %v334 = vmul.f32 %v237, %v237
      %v335 = vmul.f32 %v238, %v238
      %v336 = vmul.f32 %v239, %v239
      %v337 = vmul.f32 %v240, %v240
      %v338 = vmul.f32 %v241, %v241
      %v339 = vmul.f32 %v242, %v242
      %v340 = vmul.f32 %v243, %v243
      %v341 = vmul.f32 %v244, %v244
      %v342 = vmul.f32 %v245, %v245
      %v343 = vmul.f32 %v246, %v246
      %v344 = vmul.f32 %v247, %v247
      %v345 = vmul.f32 %v248, %v248
      %v346 = vmul.f32 %v249, %v249
      %v347 = vmul.f32 %v250, %v250
      %v348 = vmul.f32 %v251, %v251
      %v349 = vmul.f32 %v252, %v252
      %v350 = vmul.f32 %v253, %v253
      %v351 = vmul.f32 %v254, %v254
      %v352 = vsel %vm255, %v321, 0.0
      %v353 = vadd.f32 %v320, %v352
      %354 = vadd.xlane.f32.xlu0 %v353
      %v355 = vpop.xlane.xlu0 %354
      %v356 = vsel %vm255, %v323, 0.0
      %v357 = vadd.f32 %v322, %v356
      %358 = vadd.xlane.f32.xlu0 %v357
      %v359 = vpop.xlane.xlu0 %358
      %v360 = vsel %vm255, %v325, 0.0
      %v361 = vadd.f32 %v324, %v360
      %362 = vadd.xlane.f32.xlu0 %v361
      %v363 = vpop.xlane.xlu0 %362
      %v364 = vsel %vm255, %v327, 0.0
      %v365 = vadd.f32 %v326, %v364
      %366 = vadd.xlane.f32.xlu0 %v365
      %v367 = vpop.xlane.xlu0 %366
      %v368 = vsel %vm255, %v329, 0.0
      %v369 = vadd.f32 %v328, %v368
      %370 = vadd.xlane.f32.xlu0 %v369
      %v371 = vpop.xlane.xlu0 %370
      %v372 = vsel %vm255, %v331, 0.0
      %v373 = vadd.f32 %v330, %v372
      %374 = vadd.xlane.f32.xlu0 %v373
      %v375 = vpop.xlane.xlu0 %374
      %v376 = vsel %vm255, %v333, 0.0
      %v377 = vadd.f32 %v332, %v376
      %378 = vadd.xlane.f32.xlu0 %v377
      %v379 = vpop.xlane.xlu0 %378
      %v380 = vsel %vm255, %v335, 0.0
      %v381 = vadd.f32 %v334, %v380
      %382 = vadd.xlane.f32.xlu0 %v381
      %v383 = vpop.xlane.xlu0 %382
      %v384 = vsel %vm255, %v337, 0.0
      %v385 = vadd.f32 %v336, %v384
      %386 = vadd.xlane.f32.xlu0 %v385
      %v387 = vpop.xlane.xlu0 %386
      %v388 = vsel %vm255, %v339, 0.0
      %v389 = vadd.f32 %v338, %v388
      %390 = vadd.xlane.f32.xlu0 %v389
      %v391 = vpop.xlane.xlu0 %390
      %v392 = vsel %vm255, %v341, 0.0
      %v393 = vadd.f32 %v340, %v392
      %394 = vadd.xlane.f32.xlu0 %v393
      %v395 = vpop.xlane.xlu0 %394
      %v396 = vsel %vm255, %v343, 0.0
      %v397 = vadd.f32 %v342, %v396
      %398 = vadd.xlane.f32.xlu0 %v397
      %v399 = vpop.xlane.xlu0 %398
      %v400 = vsel %vm255, %v345, 0.0
      %v401 = vadd.f32 %v344, %v400
      %402 = vadd.xlane.f32.xlu0 %v401
      %v403 = vpop.xlane.xlu0 %402
      %v404 = vsel %vm255, %v347, 0.0
      %v405 = vadd.f32 %v346, %v404
      %406 = vadd.xlane.f32.xlu0 %v405
      %v407 = vpop.xlane.xlu0 %406
      %v408 = vsel %vm255, %v349, 0.0
      %v409 = vadd.f32 %v348, %v408
      %410 = vadd.xlane.f32.xlu0 %v409
      %v411 = vpop.xlane.xlu0 %410
      %v412 = vsel %vm255, %v351, 0.0
      %v413 = vadd.f32 %v350, %v412
      %414 = vadd.xlane.f32.xlu0 %v413
      %v415 = vpop.xlane.xlu0 %414
      %v416 = vmul.f32 %v259, 0.0051020407
      %v417 = vmul.f32 %v263, 0.0051020407
      %v418 = vmul.f32 %v267, 0.0051020407
      %v419 = vmul.f32 %v271, 0.0051020407
      %v420 = vmul.f32 %v275, 0.0051020407
      %v421 = vmul.f32 %v279, 0.0051020407
      %v422 = vmul.f32 %v283, 0.0051020407
      %v423 = vmul.f32 %v287, 0.0051020407
      %v424 = vmul.f32 %v291, 0.0051020407
      %v425 = vmul.f32 %v295, 0.0051020407
      %v426 = vmul.f32 %v299, 0.0051020407
      %v427 = vmul.f32 %v303, 0.0051020407
      %v428 = vmul.f32 %v307, 0.0051020407
      %v429 = vmul.f32 %v311, 0.0051020407
      %v430 = vmul.f32 %v315, 0.0051020407
      %v431 = vmul.f32 %v319, 0.0051020407
      %v432 = vmul.f32 %v355, 0.0051020407
      %v433 = vmul.f32 %v359, 0.0051020407
      %v434 = vmul.f32 %v363, 0.0051020407
      %v435 = vmul.f32 %v367, 0.0051020407
      %v436 = vmul.f32 %v371, 0.0051020407
      %v437 = vmul.f32 %v375, 0.0051020407
      %v438 = vmul.f32 %v379, 0.0051020407
      %v439 = vmul.f32 %v383, 0.0051020407
      %v440 = vmul.f32 %v387, 0.0051020407
      %v441 = vmul.f32 %v391, 0.0051020407
      %v442 = vmul.f32 %v395, 0.0051020407
      %v443 = vmul.f32 %v399, 0.0051020407
      %v444 = vmul.f32 %v403, 0.0051020407
      %v445 = vmul.f32 %v407, 0.0051020407
      %v446 = vmul.f32 %v411, 0.0051020407
      %v447 = vmul.f32 %v415, 0.0051020407
      %v448 = vmul.f32 %v416, %v416
      %v449 = vmul.f32 %v417, %v417
      %v450 = vmul.f32 %v418, %v418
      %v451 = vmul.f32 %v419, %v419
      %v452 = vmul.f32 %v420, %v420
      %v453 = vmul.f32 %v421, %v421
      %v454 = vmul.f32 %v422, %v422
      %v455 = vmul.f32 %v423, %v423
      %v456 = vmul.f32 %v424, %v424
      %v457 = vmul.f32 %v425, %v425
      %v458 = vmul.f32 %v426, %v426
      %v459 = vmul.f32 %v427, %v427
      %v460 = vmul.f32 %v428, %v428
      %v461 = vmul.f32 %v429, %v429
      %v462 = vmul.f32 %v430, %v430
      %v463 = vmul.f32 %v431, %v431
      %v464 = vsub.f32 %v432, %v448
      %v465 = vsub.f32 %v433, %v449
      %v466 = vsub.f32 %v434, %v450
      %v467 = vsub.f32 %v435, %v451
      %v468 = vsub.f32 %v436, %v452
      %v469 = vsub.f32 %v437, %v453
      %v470 = vsub.f32 %v438, %v454
      %v471 = vsub.f32 %v439, %v455
      %v472 = vsub.f32 %v440, %v456
      %v473 = vsub.f32 %v441, %v457
      %v474 = vsub.f32 %v442, %v458
      %v475 = vsub.f32 %v443, %v459
      %v476 = vsub.f32 %v444, %v460
      %v477 = vsub.f32 %v445, %v461
      %v478 = vsub.f32 %v446, %v462
      %v479 = vsub.f32 %v447, %v463
      %v480 = vadd.f32 %v464, 1e-05
      %v481 = vadd.f32 %v465, 1e-05
      %v482 = vadd.f32 %v466, 1e-05
      %v483 = vadd.f32 %v467, 1e-05
      %v484 = vadd.f32 %v468, 1e-05
      %v485 = vadd.f32 %v469, 1e-05
      %v486 = vadd.f32 %v470, 1e-05
      %v487 = vadd.f32 %v471, 1e-05
      %v488 = vadd.f32 %v472, 1e-05
      %v489 = vadd.f32 %v473, 1e-05
      %v490 = vadd.f32 %v474, 1e-05
      %v491 = vadd.f32 %v475, 1e-05
      %v492 = vadd.f32 %v476, 1e-05
      %v493 = vadd.f32 %v477, 1e-05
      %v494 = vadd.f32 %v478, 1e-05
      %v495 = vadd.f32 %v479, 1e-05
      %v496 = vrsqrt.pop %v480
      %v497 = vrsqrt.pop %v481
      %v498 = vrsqrt.pop %v482
      %v499 = vrsqrt.pop %v483
      %v500 = vrsqrt.pop %v484
      %v501 = vrsqrt.pop %v485
      %v502 = vrsqrt.pop %v486
      %v503 = vrsqrt.pop %v487
      %v504 = vrsqrt.pop %v488
      %v505 = vrsqrt.pop %v489
      %v506 = vrsqrt.pop %v490
      %v507 = vrsqrt.pop %v491
      %v508 = vrsqrt.pop %v492
      %v509 = vrsqrt.pop %v493
      %v510 = vrsqrt.pop %v494
      %v511 = vrsqrt.pop %v495
      %v512 = vld [vmem:[%s208] sm:$0xff]
      %v513 = vld [vmem:[%s208 + $0x8] sm:$0xff]
      %v514 = vld [vmem:[%s208 + $0x10] sm:$0xff]
      %v515 = vld [vmem:[%s208 + $0x18] sm:$0xff]
      %v516 = vld [vmem:[%s208 + $0x20] sm:$0xff]
      %v517 = vld [vmem:[%s208 + $0x28] sm:$0xff]
      %v518 = vld [vmem:[%s208 + $0x30] sm:$0xff]
      %v519 = vld [vmem:[%s208 + $0x38] sm:$0xff]
      %v520 = vld [vmem:[%s208 + $0x40] sm:$0xff]
      %v521 = vld [vmem:[%s208 + $0x48] sm:$0xff]
      %v522 = vld [vmem:[%s208 + $0x50] sm:$0xff]
      %v523 = vld [vmem:[%s208 + $0x58] sm:$0xff]
      %v524 = vld [vmem:[%s208 + $0x60] sm:$0xff]
      %v525 = vld [vmem:[%s208 + $0x68] sm:$0xff]
      %v526 = vld [vmem:[%s208 + $0x70] sm:$0xff]
      %v527 = vld [vmem:[%s208 + $0x78] sm:$0xff]
      %v528 = vmul.f32 %v512, %v496
      %v529 = vmul.f32 %v513, %v497
      %v530 = vmul.f32 %v514, %v498
      %v531 = vmul.f32 %v515, %v499
      %v532 = vmul.f32 %v516, %v500
      %v533 = vmul.f32 %v517, %v501
      %v534 = vmul.f32 %v518, %v502
      %v535 = vmul.f32 %v519, %v503
      %v536 = vmul.f32 %v520, %v504
      %v537 = vmul.f32 %v521, %v505
      %v538 = vmul.f32 %v522, %v506
      %v539 = vmul.f32 %v523, %v507
      %v540 = vmul.f32 %v524, %v508
      %v541 = vmul.f32 %v525, %v509
      %v542 = vmul.f32 %v526, %v510
      %v543 = vmul.f32 %v527, %v511
      %v544 = vld [vmem:[%s214] sm:$0xff]
      %v545 = vld [vmem:[%s214 + $0x8] sm:$0xff]
      %v546 = vld [vmem:[%s214 + $0x10] sm:$0xff]
      %v547 = vld [vmem:[%s214 + $0x18] sm:$0xff]
      %v548 = vld [vmem:[%s214 + $0x20] sm:$0xff]
      %v549 = vld [vmem:[%s214 + $0x28] sm:$0xff]
      %v550 = vld [vmem:[%s214 + $0x30] sm:$0xff]
      %v551 = vld [vmem:[%s214 + $0x38] sm:$0xff]
      %v552 = vld [vmem:[%s214 + $0x40] sm:$0xff]
      %v553 = vld [vmem:[%s214 + $0x48] sm:$0xff]
      %v554 = vld [vmem:[%s214 + $0x50] sm:$0xff]
      %v555 = vld [vmem:[%s214 + $0x58] sm:$0xff]
      %v556 = vld [vmem:[%s214 + $0x60] sm:$0xff]
      %v557 = vld [vmem:[%s214 + $0x68] sm:$0xff]
      %v558 = vld [vmem:[%s214 + $0x70] sm:$0xff]
      %v559 = vld [vmem:[%s214 + $0x78] sm:$0xff]
      %v560 = vmul.f32 %v416, %v528
      %v561 = vmul.f32 %v417, %v529
      %v562 = vmul.f32 %v418, %v530
      %v563 = vmul.f32 %v419, %v531
      %v564 = vmul.f32 %v420, %v532
      %v565 = vmul.f32 %v421, %v533
      %v566 = vmul.f32 %v422, %v534
      %v567 = vmul.f32 %v423, %v535
      %v568 = vmul.f32 %v424, %v536
      %v569 = vmul.f32 %v425, %v537
      %v570 = vmul.f32 %v426, %v538
      %v571 = vmul.f32 %v427, %v539
      %v572 = vmul.f32 %v428, %v540
      %v573 = vmul.f32 %v429, %v541
      %v574 = vmul.f32 %v430, %v542
      %v575 = vmul.f32 %v431, %v543
      %v576 = vsub.f32 %v544, %v560
      %v577 = vsub.f32 %v545, %v561
      %v578 = vsub.f32 %v546, %v562
      %v579 = vsub.f32 %v547, %v563
      %v580 = vsub.f32 %v548, %v564
      %v581 = vsub.f32 %v549, %v565
      %v582 = vsub.f32 %v550, %v566
      %v583 = vsub.f32 %v551, %v567
      %v584 = vsub.f32 %v552, %v568
      %v585 = vsub.f32 %v553, %v569
      %v586 = vsub.f32 %v554, %v570
      %v587 = vsub.f32 %v555, %v571
      %v588 = vsub.f32 %v556, %v572
      %v589 = vsub.f32 %v557, %v573
      %v590 = vsub.f32 %v558, %v574
      %v591 = vsub.f32 %v559, %v575
      %593 = vset.pattern.permute.xlu0 0
      %594 = vperm.xlu0 %593, %v528
      %v595 = vpop.permute.xlu0 %594
      %598 = vset.pattern.permute.xlu0 0
      %599 = vperm.xlu0 %598, %v529
      %v600 = vpop.permute.xlu0 %599
      %603 = vset.pattern.permute.xlu0 0
      %604 = vperm.xlu0 %603, %v530
      %v605 = vpop.permute.xlu0 %604
      %608 = vset.pattern.permute.xlu0 0
      %609 = vperm.xlu0 %608, %v531
      %v610 = vpop.permute.xlu0 %609
      %613 = vset.pattern.permute.xlu0 0
      %614 = vperm.xlu0 %613, %v532
      %v615 = vpop.permute.xlu0 %614
      %618 = vset.pattern.permute.xlu0 0
      %619 = vperm.xlu0 %618, %v533
      %v620 = vpop.permute.xlu0 %619
      %623 = vset.pattern.permute.xlu0 0
      %624 = vperm.xlu0 %623, %v534
      %v625 = vpop.permute.xlu0 %624
      %628 = vset.pattern.permute.xlu0 0
      %629 = vperm.xlu0 %628, %v535
      %v630 = vpop.permute.xlu0 %629
      %633 = vset.pattern.permute.xlu0 0
      %634 = vperm.xlu0 %633, %v536
      %v635 = vpop.permute.xlu0 %634
      %638 = vset.pattern.permute.xlu0 0
      %639 = vperm.xlu0 %638, %v537
      %v640 = vpop.permute.xlu0 %639
      %643 = vset.pattern.permute.xlu0 0
      %644 = vperm.xlu0 %643, %v538
      %v645 = vpop.permute.xlu0 %644
      %648 = vset.pattern.permute.xlu0 0
      %649 = vperm.xlu0 %648, %v539
      %v650 = vpop.permute.xlu0 %649
      %653 = vset.pattern.permute.xlu0 0
      %654 = vperm.xlu0 %653, %v540
      %v655 = vpop.permute.xlu0 %654
      %658 = vset.pattern.permute.xlu0 0
      %659 = vperm.xlu0 %658, %v541
      %v660 = vpop.permute.xlu0 %659
      %663 = vset.pattern.permute.xlu0 0
      %664 = vperm.xlu0 %663, %v542
      %v665 = vpop.permute.xlu0 %664
      %668 = vset.pattern.permute.xlu0 0
      %669 = vperm.xlu0 %668, %v543
      %v670 = vpop.permute.xlu0 %669
      %v672 = vmul.f32 %v223, %v595
      %v673 = vmul.f32 %v224, %v595
      %v674 = vmul.f32 %v225, %v600
      %v675 = vmul.f32 %v226, %v600
      %v676 = vmul.f32 %v227, %v605
      %v677 = vmul.f32 %v228, %v605
      %v678 = vmul.f32 %v229, %v610
      %v679 = vmul.f32 %v230, %v610
      %v680 = vmul.f32 %v231, %v615
      %v681 = vmul.f32 %v232, %v615
      %v682 = vmul.f32 %v233, %v620
      %v683 = vmul.f32 %v234, %v620
      %v684 = vmul.f32 %v235, %v625
      %v685 = vmul.f32 %v236, %v625
      %v686 = vmul.f32 %v237, %v630
      %v687 = vmul.f32 %v238, %v630
      %v688 = vmul.f32 %v239, %v635
      %v689 = vmul.f32 %v240, %v635
      %v690 = vmul.f32 %v241, %v640
      %v691 = vmul.f32 %v242, %v640
      %v692 = vmul.f32 %v243, %v645
      %v693 = vmul.f32 %v244, %v645
      %v694 = vmul.f32 %v245, %v650
      %v695 = vmul.f32 %v246, %v650
      %v696 = vmul.f32 %v247, %v655
      %v697 = vmul.f32 %v248, %v655
      %v698 = vmul.f32 %v249, %v660
      %v699 = vmul.f32 %v250, %v660
      %v700 = vmul.f32 %v251, %v665
      %v701 = vmul.f32 %v252, %v665
      %v702 = vmul.f32 %v253, %v670
      %v703 = vmul.f32 %v254, %v670
      %705 = vset.pattern.permute.xlu0 0
      %706 = vperm.xlu0 %705, %v576
      %v707 = vpop.permute.xlu0 %706
      %710 = vset.pattern.permute.xlu0 0
      %711 = vperm.xlu0 %710, %v577
      %v712 = vpop.permute.xlu0 %711
      %715 = vset.pattern.permute.xlu0 0
      %716 = vperm.xlu0 %715, %v578
      %v717 = vpop.permute.xlu0 %716
      %720 = vset.pattern.permute.xlu0 0
      %721 = vperm.xlu0 %720, %v579
      %v722 = vpop.permute.xlu0 %721
      %725 = vset.pattern.permute.xlu0 0
      %726 = vperm.xlu0 %725, %v580
      %v727 = vpop.permute.xlu0 %726
      %730 = vset.pattern.permute.xlu0 0
      %731 = vperm.xlu0 %730, %v581
      %v732 = vpop.permute.xlu0 %731
      %735 = vset.pattern.permute.xlu0 0
      %736 = vperm.xlu0 %735, %v582
      %v737 = vpop.permute.xlu0 %736
      %740 = vset.pattern.permute.xlu0 0
      %741 = vperm.xlu0 %740, %v583
      %v742 = vpop.permute.xlu0 %741
      %745 = vset.pattern.permute.xlu0 0
      %746 = vperm.xlu0 %745, %v584
      %v747 = vpop.permute.xlu0 %746
      %750 = vset.pattern.permute.xlu0 0
      %751 = vperm.xlu0 %750, %v585
      %v752 = vpop.permute.xlu0 %751
      %755 = vset.pattern.permute.xlu0 0
      %756 = vperm.xlu0 %755, %v586
      %v757 = vpop.permute.xlu0 %756
      %760 = vset.pattern.permute.xlu0 0
      %761 = vperm.xlu0 %760, %v587
      %v762 = vpop.permute.xlu0 %761
      %765 = vset.pattern.permute.xlu0 0
      %766 = vperm.xlu0 %765, %v588
      %v767 = vpop.permute.xlu0 %766
      %770 = vset.pattern.permute.xlu0 0
      %771 = vperm.xlu0 %770, %v589
      %v772 = vpop.permute.xlu0 %771
      %775 = vset.pattern.permute.xlu0 0
      %776 = vperm.xlu0 %775, %v590
      %v777 = vpop.permute.xlu0 %776
      %780 = vset.pattern.permute.xlu0 0
      %781 = vperm.xlu0 %780, %v591
      %v782 = vpop.permute.xlu0 %781
      %v784 = vadd.f32 %v672, %v707
      %v785 = vadd.f32 %v673, %v707
      %v786 = vadd.f32 %v674, %v712
      %v787 = vadd.f32 %v675, %v712
      %v788 = vadd.f32 %v676, %v717
      %v789 = vadd.f32 %v677, %v717
      %v790 = vadd.f32 %v678, %v722
      %v791 = vadd.f32 %v679, %v722
      %v792 = vadd.f32 %v680, %v727
      %v793 = vadd.f32 %v681, %v727
      %v794 = vadd.f32 %v682, %v732
      %v795 = vadd.f32 %v683, %v732
      %v796 = vadd.f32 %v684, %v737
      %v797 = vadd.f32 %v685, %v737
      %v798 = vadd.f32 %v686, %v742
      %v799 = vadd.f32 %v687, %v742
      %v800 = vadd.f32 %v688, %v747
      %v801 = vadd.f32 %v689, %v747
      %v802 = vadd.f32 %v690, %v752
      %v803 = vadd.f32 %v691, %v752
      %v804 = vadd.f32 %v692, %v757
      %v805 = vadd.f32 %v693, %v757
      %v806 = vadd.f32 %v694, %v762
      %v807 = vadd.f32 %v695, %v762
      %v808 = vadd.f32 %v696, %v767
      %v809 = vadd.f32 %v697, %v767
      %v810 = vadd.f32 %v698, %v772
      %v811 = vadd.f32 %v699, %v772
      %v812 = vadd.f32 %v700, %v777
      %v813 = vadd.f32 %v701, %v777
      %v814 = vadd.f32 %v702, %v782
      %v815 = vadd.f32 %v703, %v782
      %v816 = vmax.f32 %v784, 0.0
      %v817 = vmax.f32 %v785, 0.0
      %v818 = vmax.f32 %v786, 0.0
      %v819 = vmax.f32 %v787, 0.0
      %v820 = vmax.f32 %v788, 0.0
      %v821 = vmax.f32 %v789, 0.0
      %v822 = vmax.f32 %v790, 0.0
      %v823 = vmax.f32 %v791, 0.0
      %v824 = vmax.f32 %v792, 0.0
      %v825 = vmax.f32 %v793, 0.0
      %v826 = vmax.f32 %v794, 0.0
      %v827 = vmax.f32 %v795, 0.0
      %v828 = vmax.f32 %v796, 0.0
      %v829 = vmax.f32 %v797, 0.0
      %v830 = vmax.f32 %v798, 0.0
      %v831 = vmax.f32 %v799, 0.0
      %v832 = vmax.f32 %v800, 0.0
      %v833 = vmax.f32 %v801, 0.0
      %v834 = vmax.f32 %v802, 0.0
      %v835 = vmax.f32 %v803, 0.0
      %v836 = vmax.f32 %v804, 0.0
      %v837 = vmax.f32 %v805, 0.0
      %v838 = vmax.f32 %v806, 0.0
      %v839 = vmax.f32 %v807, 0.0
      %v840 = vmax.f32 %v808, 0.0
      %v841 = vmax.f32 %v809, 0.0
      %v842 = vmax.f32 %v810, 0.0
      %v843 = vmax.f32 %v811, 0.0
      %v844 = vmax.f32 %v812, 0.0
      %v845 = vmax.f32 %v813, 0.0
      %v846 = vmax.f32 %v814, 0.0
      %v847 = vmax.f32 %v815, 0.0
      %848 = vst [vmem:[%s221] sm:$0xff] %v816
      %849 = vst.msk [vmem:[%s221 + $0x8] sm:$0xff] %vm255, %v817
      %850 = vst [vmem:[%s221 + $0x10] sm:$0xff] %v818
      %851 = vst.msk [vmem:[%s221 + $0x18] sm:$0xff] %vm255, %v819
      %852 = vst [vmem:[%s221 + $0x20] sm:$0xff] %v820
      %853 = vst.msk [vmem:[%s221 + $0x28] sm:$0xff] %vm255, %v821
      %854 = vst [vmem:[%s221 + $0x30] sm:$0xff] %v822
      %855 = vst.msk [vmem:[%s221 + $0x38] sm:$0xff] %vm255, %v823
      %856 = vst [vmem:[%s221 + $0x40] sm:$0xff] %v824
      %857 = vst.msk [vmem:[%s221 + $0x48] sm:$0xff] %vm255, %v825
      %858 = vst [vmem:[%s221 + $0x50] sm:$0xff] %v826
      %859 = vst.msk [vmem:[%s221 + $0x58] sm:$0xff] %vm255, %v827
      %860 = vst [vmem:[%s221 + $0x60] sm:$0xff] %v828
      %861 = vst.msk [vmem:[%s221 + $0x68] sm:$0xff] %vm255, %v829
      %862 = vst [vmem:[%s221 + $0x70] sm:$0xff] %v830
      %863 = vst.msk [vmem:[%s221 + $0x78] sm:$0xff] %vm255, %v831
      %864 = vst [vmem:[%s221 + $0x80] sm:$0xff] %v832
      %865 = vst.msk [vmem:[%s221 + $0x88] sm:$0xff] %vm255, %v833
      %866 = vst [vmem:[%s221 + $0x90] sm:$0xff] %v834
      %867 = vst.msk [vmem:[%s221 + $0x98] sm:$0xff] %vm255, %v835
      %868 = vst [vmem:[%s221 + $0xa0] sm:$0xff] %v836
      %869 = vst.msk [vmem:[%s221 + $0xa8] sm:$0xff] %vm255, %v837
      %870 = vst [vmem:[%s221 + $0xb0] sm:$0xff] %v838
      %871 = vst.msk [vmem:[%s221 + $0xb8] sm:$0xff] %vm255, %v839
      %872 = vst [vmem:[%s221 + $0xc0] sm:$0xff] %v840
      %873 = vst.msk [vmem:[%s221 + $0xc8] sm:$0xff] %vm255, %v841
      %874 = vst [vmem:[%s221 + $0xd0] sm:$0xff] %v842
      %875 = vst.msk [vmem:[%s221 + $0xd8] sm:$0xff] %vm255, %v843
      %876 = vst [vmem:[%s221 + $0xe0] sm:$0xff] %v844
      %877 = vst.msk [vmem:[%s221 + $0xe8] sm:$0xff] %vm255, %v845
      %878 = vst [vmem:[%s221 + $0xf0] sm:$0xff] %v846
      %879 = vst.msk [vmem:[%s221 + $0xf8] sm:$0xff] %vm255, %v847
      %s880 = smul.u32 16, %s14
      %p881 = scmp.lt.s32.totalorder %s880, 31
      %s882 = scalar_select %p881, %s880, 31
      %s883 = smul.addr %s882, 2
      %s884 = smul.addr %s883, 8
      %s885 = scalar_lea.vmem %s3, %s884
      // Predicated region
      $region33: #{tpu_custom_call.1} parent=31 // pred_check
        %p886 = pneg %p110
      $region34: #{tpu_custom_call.1} parent=31 // pred_check_branch
        %888 = sbr.rel (%p886) target = $region36
      $region35: #{tpu_custom_call.1} parent=31 // pred_region
        %s889 = smul.u32 16, %s14
      $region36: #{tpu_custom_call.1} parent=31 // pred_fallthru
        _
    $region32: #{tpu_custom_call.1} parent=5 // pred_fallthru
      _
    %p890 = scmp.le.s32.totalorder 2, %s9
    // Predicated region
    $region37: #{tpu_custom_call.1} parent=5 // pred_check
      %p891 = pneg %p890
    $region38: #{tpu_custom_call.1} parent=5 // pred_check_branch
      %893 = sbr.rel (%p891) target = $region40
    $region39: #{tpu_custom_call.1} parent=5 // pred_region
      %s894 = ssub.s32 %s9, 2
      // Predicated region
      $region41: #{tpu_custom_call.1} parent=39 // pred_check
        %p895 = pneg %p116
      $region42: #{tpu_custom_call.1} parent=39 // pred_check_branch
        %897 = sbr.rel (%p895) target = $region44
      $region43: #{tpu_custom_call.1} parent=39 // pred_region
        %s898 = smul.u32 16, %s15
        %p899 = scmp.lt.s32.totalorder %s898, 31
        %s900 = scalar_select %p899, %s898, 31
        %s901 = smul.addr %s900, 2
        %s902 = smul.addr %s901, 8
        %s903 = scalar_lea.vmem %s3, %s902
      $region44: #{tpu_custom_call.1} parent=39 // pred_fallthru
        _
    $region40: #{tpu_custom_call.1} parent=5 // pred_fallthru
      _
  $region6: #{tpu_custom_call.1} parent=0 // loop_footer
    %s13 = sadd.s32 1, %s9
  $region7: #{tpu_custom_call.1} parent=0 // loop_footer_branch
    %8 = sbr.rel target = $region3
  $region8: #{tpu_custom_call.1} parent=0 // loop_exit
    _

</llo_original>
